<compile_context>
chip_gen: v7x
topology: tpu7x:2x2x1
jax: 0.10.0
libtpu: 0.0.40
codegen_flags: <defaults>
</compile_context>

<pallas_src>
import functools

import jax
import jax.numpy as jnp
from jax.experimental import pallas as pl
from jax.experimental.pallas import tpu as pltpu


def _round_up(x, m):
    return (x + m - 1) // m * m


def _sublane_multiple(*dtypes):
    """Minimum sublane tile multiple for the given dtypes (8/16/32 for 4/2/1 B)."""
    return max({4: 8, 2: 16, 1: 32}[jnp.dtype(d).itemsize] for d in dtypes)


def _choose_token_tile(n_tokens, sublane, cap=4096):
    """Balanced token (row) tiling.

    grid_m is chosen first (cdiv by the cap; >=2 and even so both v7x
    TensorCores get equal work), then tm = round_up(cdiv(n, grid_m), sublane),
    so the last tile carries at most ~sublane rows of padding instead of a
    mostly-empty tail.  At tm=4096 the double-buffered VMEM is only a few MiB.
    """
    if n_tokens <= sublane:
        return n_tokens, 1                       # single full-extent block
    grid_m = max(pl.cdiv(n_tokens, cap), 2)      # >=2 steps for v7x's 2 TCs
    if grid_m % 2:
        grid_m += 1                              # even split across TCs
    tm = _round_up(pl.cdiv(n_tokens, grid_m), sublane)
    grid_m = pl.cdiv(n_tokens, tm)               # drop fully-empty tiles
    return tm, grid_m


def _patch_embed_kernel(x_ref, w_ref, b_ref, g_ref, bt_ref, o_ref, *,
                        apply_norm, eps):
    # x_ref: (tm, patch_dim)   w_ref: (patch_dim, E)   b/g/bt_ref: (1, E)
    y = jnp.dot(x_ref[...], w_ref[...], preferred_element_type=jnp.float32)
    y = y + b_ref[...]
    if apply_norm:
        mean = jnp.mean(y, axis=-1, keepdims=True)
        yc = y - mean
        var = jnp.mean(yc * yc, axis=-1, keepdims=True)
        y = yc * jax.lax.rsqrt(var + eps) * g_ref[...] + bt_ref[...]
    o_ref[...] = y.astype(o_ref.dtype)


def patch_embed_forward(x, weight, bias, patch_size=4, gamma=None, beta=None,
                        eps=1e-5, out_dtype=None):
    """x: (B, C, H, W).  weight: (E, C, P, P).  bias: (E,).
    gamma/beta: optional (E,) LayerNorm affine params (SwinTransformer
    patch_norm=True); if None the norm is Identity (PatchEmbed default).
    out_dtype: activation dtype of the downstream blocks (default: x.dtype).

    Returns (tokens, Hp, Wp) with tokens of shape (B, Hp*Wp, E).
    """
    B, C, H, W = x.shape
    P = patch_size
    embed_dim = weight.shape[0]
    out_dtype = x.dtype if out_dtype is None else jnp.dtype(out_dtype)

    # Same padding semantics as F.pad(..., (0, P - W%P, 0, P - H%P)).
    pad_h = (P - H % P) % P
    pad_w = (P - W % P) % P
    if pad_h or pad_w:
        x = jnp.pad(x, ((0, 0), (0, 0), (0, pad_h), (0, pad_w)))
    Hp, Wp = x.shape[2] // P, x.shape[3] // P

    # Patch rearrange, flattened in (C, P, P) order to match Conv2d weights.
    # No row/lane padding afterwards, so this producer chain can fuse into the
    # pallas_call's operand-0 input DMA (allow_input_fusion).
    xp = x.reshape(B, C, Hp, P, Wp, P)
    xp = jnp.transpose(xp, (0, 2, 4, 1, 3, 5))           # (B, Hp, Wp, C, P, P)
    patches = xp.reshape(B * Hp * Wp, C * P * P)         # (n_tokens, patch_dim)
    n_tokens, patch_dim = patches.shape

    sublane = _sublane_multiple(x.dtype, out_dtype)
    tm, grid_m = _choose_token_tile(n_tokens, sublane)

    # True-width weights / bias: no lane padding (see header).
    w2d = weight.reshape(embed_dim, patch_dim).T.astype(jnp.float32)
    b2d = bias.reshape(1, embed_dim).astype(jnp.float32)
    apply_norm = gamma is not None
    if apply_norm:
        g2d = gamma.reshape(1, embed_dim).astype(jnp.float32)
        bt2d = beta.reshape(1, embed_dim).astype(jnp.float32)
    else:
        g2d = jnp.zeros((1, embed_dim), jnp.float32)
        bt2d = jnp.zeros((1, embed_dim), jnp.float32)

    kernel = functools.partial(_patch_embed_kernel, apply_norm=apply_norm,
                               eps=eps)

    # Fused traffic: read x once (= patches bytes), write tokens once, params.
    in_bytes = n_tokens * patch_dim * jnp.dtype(x.dtype).itemsize
    out_bytes = n_tokens * embed_dim * out_dtype.itemsize
    param_bytes = 4 * (patch_dim * embed_dim + 3 * embed_dim)

    out = pl.pallas_call(
        kernel,
        out_shape=jax.ShapeDtypeStruct((n_tokens, embed_dim), out_dtype),
        grid_spec=pltpu.PrefetchScalarGridSpec(
            num_scalar_prefetch=0,
            grid=(grid_m,),
            in_specs=[
                pl.BlockSpec((tm, patch_dim), lambda i: (i, 0)),
                pl.BlockSpec((patch_dim, embed_dim), lambda i: (0, 0)),
                pl.BlockSpec((1, embed_dim), lambda i: (0, 0)),
                pl.BlockSpec((1, embed_dim), lambda i: (0, 0)),
                pl.BlockSpec((1, embed_dim), lambda i: (0, 0)),
            ],
            out_specs=pl.BlockSpec((tm, embed_dim), lambda i: (i, 0)),
        ),
        compiler_params=pltpu.CompilerParams(
            dimension_semantics=("parallel",),
            # Let XLA fuse the patchify reshape/transpose (+ spatial pad) into
            # the kernel's operand-0 input DMA -> no HBM round-trip for
            # `patches`.  Requires no intervening pad/copy on that operand.
            allow_input_fusion=[True, False, False, False, False],
            # Double-buffered input + output blocks + resident params:
            # 2*tm*(patch_dim + embed_dim)*4B + small params ~= 8 MiB at
            # tm=4096, patch_dim=48, E=192 -- well under the 32 MiB scoped
            # limit on every generation (incl. v7x's 64 MiB physical VMEM).
            vmem_limit_bytes=32 * 1024 * 1024,
        ),
        cost_estimate=pl.CostEstimate(
            flops=2 * n_tokens * patch_dim * embed_dim,
            transcendentals=n_tokens if apply_norm else 0,
            bytes_accessed=in_bytes + out_bytes + param_bytes),
    )(patches, w2d, b2d, g2d, bt2d)

    # Row-major (B*Hp*Wp, E) -> (B, Hp*Wp, E) is a metadata-only bitcast:
    # no slice, no copy.
    tokens = out.reshape(B, Hp * Wp, embed_dim)
    return tokens, Hp, Wp


def _reference(x, weight, bias, patch_size=4, gamma=None, beta=None, eps=1e-5):
    """Pure-JAX reference: pad -> strided conv -> flatten(2).transpose(1,2) [-> LN]."""
    P = patch_size
    _, _, H, W = x.shape
    pad_h = (P - H % P) % P
    pad_w = (P - W % P) % P
    if pad_h or pad_w:
        x = jnp.pad(x, ((0, 0), (0, 0), (0, pad_h), (0, pad_w)))
    y = jax.lax.conv_general_dilated(
        x, weight,
        window_strides=(P, P),
        padding="VALID",
        dimension_numbers=("NCHW", "OIHW", "NCHW"),
    ) + bias.reshape(1, -1, 1, 1)
    B, E, Hp, Wp = y.shape
    tok = jnp.transpose(y.reshape(B, E, Hp * Wp), (0, 2, 1))
    if gamma is not None:
        mu = jnp.mean(tok, axis=-1, keepdims=True)
        var = jnp.mean((tok - mu) ** 2, axis=-1, keepdims=True)
        tok = (tok - mu) * jax.lax.rsqrt(var + eps) * gamma + beta
    return tok, Hp, Wp


if __name__ == "__main__":
    key = jax.random.PRNGKey(0)
    k_x, k_w, k_b, k_g, k_bt, k_x2 = jax.random.split(key, 6)

    B, C, H, W = 2, 4, 16, 16
    patch_size = 4
    embed_dim = 32

    x = jax.random.normal(k_x, (B, C, H, W), dtype=jnp.float32)
    weight = (jax.random.normal(k_w, (embed_dim, C, patch_size, patch_size),
                                dtype=jnp.float32) * 0.02)
    bias = jax.random.normal(k_b, (embed_dim,), dtype=jnp.float32) * 0.01
    gamma = 1.0 + 0.1 * jax.random.normal(k_g, (embed_dim,), dtype=jnp.float32)
    beta = 0.05 * jax.random.normal(k_bt, (embed_dim,), dtype=jnp.float32)

    # 1) PatchEmbed with norm=Identity (PatchEmbed's default constructor).
    tokens, Hp, Wp = patch_embed_forward(x, weight, bias, patch_size)
    tokens = jax.block_until_ready(tokens)
    ref, rHp, rWp = _reference(x, weight, bias, patch_size)
    assert tokens.shape == (B, Hp * Wp, embed_dim)
    assert (Hp, Wp) == (rHp, rWp)
    assert jnp.allclose(tokens, ref, atol=1e-4, rtol=1e-4)

    # 2) PatchEmbed + fused LayerNorm (SwinTransformer uses patch_norm=True).
    tok_n, _, _ = patch_embed_forward(x, weight, bias, patch_size,
                                      gamma=gamma, beta=beta)
    tok_n = jax.block_until_ready(tok_n)
    ref_n, _, _ = _reference(x, weight, bias, patch_size, gamma=gamma, beta=beta)
    assert jnp.allclose(tok_n, ref_n, atol=5e-4, rtol=5e-4)

    # 3) Non-divisible H/W: exercises spatial zero-pad and the ragged (masked)
    #    last token tile without any wrapper-side row padding.
    x2 = jax.random.normal(k_x2, (B, C, 18, 14), dtype=jnp.float32)
    tok2, Hp2, Wp2 = patch_embed_forward(x2, weight, bias, patch_size,
                                         gamma=gamma, beta=beta)
    tok2 = jax.block_until_ready(tok2)
    ref2, rHp2, rWp2 = _reference(x2, weight, bias, patch_size,
                                  gamma=gamma, beta=beta)
    assert (Hp2, Wp2) == (rHp2, rWp2) == (5, 4)
    assert jnp.allclose(tok2, ref2, atol=5e-4, rtol=5e-4)

    print("KERNEL_OK")
</pallas_src>

<mosaic_0001>
module attributes {stable_mosaic.version = 11 : i64} {
  func.func @_patch_embed_kernel(%arg0: i32, %arg1: memref<16x64xf32, #tpu.memory_space<vmem>>, %arg2: memref<64x32xf32, #tpu.memory_space<vmem>>, %arg3: memref<1x32xf32, #tpu.memory_space<vmem>>, %arg4: memref<1x32xf32, #tpu.memory_space<vmem>>, %arg5: memref<1x32xf32, #tpu.memory_space<vmem>>, %arg6: memref<16x32xf32, #tpu.memory_space<vmem>>) attributes {dimension_semantics = [#tpu.dimension_semantics<parallel>], iteration_bounds = array<i64: 2>, scalar_prefetch = 0 : i64, scratch_operands = 0 : i64, tpu.core_type = #tpu.core_type<tc>, window_params = [{transform_indices = @transform_0, window_bounds = array<i64: 16, 64>}, {pipeline_mode = #tpu.pipeline_mode<synchronous>, transform_indices = @transform_1, window_bounds = array<i64: 64, 32>}, {pipeline_mode = #tpu.pipeline_mode<synchronous>, transform_indices = @transform_2, window_bounds = array<i64: 1, 32>}, {pipeline_mode = #tpu.pipeline_mode<synchronous>, transform_indices = @transform_3, window_bounds = array<i64: 1, 32>}, {pipeline_mode = #tpu.pipeline_mode<synchronous>, transform_indices = @transform_4, window_bounds = array<i64: 1, 32>}, {transform_indices = @transform_5, window_bounds = array<i64: 16, 32>}]} {
    %c0 = arith.constant 0 : index
    %c0_0 = arith.constant 0 : index
    %0 = vector.load %arg1[%c0, %c0_0] : memref<16x64xf32, #tpu.memory_space<vmem>>, vector<16x64xf32>
    %c0_1 = arith.constant 0 : index
    %c0_2 = arith.constant 0 : index
    %1 = vector.load %arg2[%c0_1, %c0_2] : memref<64x32xf32, #tpu.memory_space<vmem>>, vector<64x32xf32>
    %cst = arith.constant dense<0.000000e+00> : vector<16x32xf32>
    %2 = tpu.matmul %0, %1, %cst {dimension_numbers = #tpu.dot_dimension_numbers<[1], [0], [0], [1], [0, 0, 1, 1], [], []>} : vector<16x64xf32>, vector<64x32xf32>, vector<16x32xf32> -> vector<16x32xf32>
    %c0_3 = arith.constant 0 : index
    %c0_4 = arith.constant 0 : index
    %3 = vector.load %arg3[%c0_3, %c0_4] : memref<1x32xf32, #tpu.memory_space<vmem>>, vector<1x32xf32>
    %4 = vector.broadcast %3 : vector<1x32xf32> to vector<16x32xf32>
    %5 = arith.addf %2, %4 : vector<16x32xf32>
    %c0_5 = arith.constant 0 : index
    %c0_6 = arith.constant 0 : index
    %6 = vector.load %arg6[%c0_5, %c0_6] : memref<16x32xf32, #tpu.memory_space<vmem>>, vector<16x32xf32>
    tpu.vector_store %arg6[%c0_5, %c0_6], %5 {strides = array<i32>} : memref<16x32xf32, #tpu.memory_space<vmem>>, vector<16x32xf32>,
    return
  }
  func.func @transform_0(%arg0: i32) -> (i32, i32) {
    %c0_i32 = arith.constant 0 : i32
    %c0_i32_0 = arith.constant 0 : i32
    return %arg0, %c0_i32 : i32, i32
  }
  func.func @transform_1(%arg0: i32) -> (i32, i32) {
    %c0_i32 = arith.constant 0 : i32
    %c0_i32_0 = arith.constant 0 : i32
    %c0_i32_1 = arith.constant 0 : i32
    return %c0_i32, %c0_i32_0 : i32, i32
  }
  func.func @transform_2(%arg0: i32) -> (i32, i32) {
    %c0_i32 = arith.constant 0 : i32
    %c0_i32_0 = arith.constant 0 : i32
    %c0_i32_1 = arith.constant 0 : i32
    return %c0_i32, %c0_i32_0 : i32, i32
  }
  func.func @transform_3(%arg0: i32) -> (i32, i32) {
    %c0_i32 = arith.constant 0 : i32
    %c0_i32_0 = arith.constant 0 : i32
    %c0_i32_1 = arith.constant 0 : i32
    return %c0_i32, %c0_i32_0 : i32, i32
  }
  func.func @transform_4(%arg0: i32) -> (i32, i32) {
    %c0_i32 = arith.constant 0 : i32
    %c0_i32_0 = arith.constant 0 : i32
    %c0_i32_1 = arith.constant 0 : i32
    return %c0_i32, %c0_i32_0 : i32, i32
  }
  func.func @transform_5(%arg0: i32) -> (i32, i32) {
    %c0_i32 = arith.constant 0 : i32
    %c0_i32_0 = arith.constant 0 : i32
    return %arg0, %c0_i32 : i32, i32
  }
}

</mosaic_0001>

<llo_original>
// kernel: tpu_custom_call.1
$region0: #{tpu_custom_call.1}
  #allocation0 [shape = 'u32[]', space=smem, size = 0x4, offset = 0x4, fixed_abs, tag = 'smem constant byte address 0x4 - core index']
  #allocation1 [shape = 'u32[144,128]{1,0:T(1,128)}', space=vmem, size = 0x12000, scoped, tag = 'internal scratch']
  %s0 = inlined_call_operand.vmem [shape: f32[32,64], index: 0, kind: input, shape index: {}]
  %s1 = inlined_call_operand.vmem [shape: f32[64,32], index: 1, kind: input, shape index: {}]
  %s2 = inlined_call_operand.vmem [shape: f32[1,32], index: 2, kind: input, shape index: {}]
  %s3 = inlined_call_operand.vmem [shape: f32[1,32], index: 3, kind: input, shape index: {}]
  %s4 = inlined_call_operand.vmem [shape: f32[1,32], index: 4, kind: input, shape index: {}]
  %s5 = inlined_call_operand.hbm [shape: f32[32,32], index: 5, kind: output, shape index: {}]
  %s6 = sld [smem:[#allocation0]]
  $region53: #{tpu_custom_call.1} parent=0
    _
  %s8 = ssub.s32 1, %s6
  %s9 = scalar_select 0, %s8, %s6
  $region1: #{tpu_custom_call.1} parent=0
    #allocation2 [shape = 'u8[16384]{0}', space=vmem, size = 0x4000, scoped, tag = 'output window, operand 0']
    #allocation3 [shape = 's32[2]{0}', space=sflag, size = 0x8, scoped, tag = 'scoped memory for tpu_custom_call.1']
    %10 = vsyncpa [#allocation3], 0
    %s11 = scalar_lea.sflag [#allocation3], 1
    %12 = vsyncpa %s11, 0
    loop: start=0, step=1, limit=4
    $region2: #{tpu_custom_call.1} parent=1 // loop_pre_header
      _
    $region3: #{tpu_custom_call.1} parent=1 // loop_header
      %s14 = sphi 0, %s18
      %p15 = scmp.ge.s32.totalorder %s14, 4
      %s24 = sphi 0, %s26
      %s27 = sphi 0, %s24
      %s28 = sphi 0, %s27
      %s44 = sphi 0, %s28
      %s48 = sphi 0, %s48
      %s50 = sphi 0, %s48
      %s51 = sphi 0, %s50
      %s65 = sphi 0, %s51
      %s69 = sphi 0, %s69
      %s71 = sphi 0, %s69
      %s72 = sphi 0, %s71
      %s86 = sphi 0, %s72
      %s90 = sphi 0, %s90
      %s92 = sphi 0, %s90
      %s93 = sphi 0, %s92
      %s107 = sphi 0, %s93
      %s111 = sphi 0, %s111
      %s113 = sphi 0, %s111
      %s114 = sphi 0, %s113
      %s128 = sphi 0, %s114
      %s134 = sphi 0, %s136
      %s137 = sphi 0, %s134
      %s138 = sphi 0, %s137
      %s154 = sphi 0, %s138
    $region4: #{tpu_custom_call.1} parent=1 // loop_header_branch
      %17 = sbr.rel (%p15) target = $region8
    $region5: #{tpu_custom_call.1} parent=1 // loop_body
      %s19 = ssub.s32 %s14, 1
      %s20 = ssub.s32 %s14, 2
      %s21 = sadd.s32 %s14, 1
      %s22 = ssub.s32 %s14, %s21
      %p23 = scmp.eq.s32.totalorder %s22, 0
      %s25 = sadd.s32 %s24, 1
      %s26 = scalar_select %p23, %s24, %s25
      %p29 = pneg %p23
      %p30 = scmp.eq.s32.totalorder %s14, 1
      %p31 = por %p29, %p30
      %p32 = scmp.ne.s32.totalorder %s24, %s27
      %p33 = scmp.eq.s32.totalorder %s14, 0
      %p34 = por %p32, %p33
      %p35 = scmp.ne.s32.totalorder %s24, %s27
      %p36 = scmp.eq.s32.totalorder %s19, 1
      %p37 = por %p35, %p36
      %p38 = scmp.ne.s32.totalorder %s27, %s28
      %p39 = scmp.eq.s32.totalorder %s19, 0
      %p40 = por %p38, %p39
      %p41 = scmp.ne.s32.totalorder %s27, %s28
      %p42 = scmp.eq.s32.totalorder %s20, 1
      %p43 = por %p41, %p42
      %p45 = scmp.ne.s32.totalorder %s28, %s44
      %p46 = scmp.eq.s32.totalorder %s20, 0
      %p47 = por %p45, %p46
      %s49 = sadd.s32 %s48, 1
      %p52 = scmp.eq.s32.totalorder %s14, 1
      %p53 = scmp.ne.s32.totalorder %s48, %s50
      %p54 = scmp.eq.s32.totalorder %s14, 0
      %p55 = por %p53, %p54
      %p56 = scmp.ne.s32.totalorder %s48, %s50
      %p57 = scmp.eq.s32.totalorder %s19, 1
      %p58 = por %p56, %p57
      %p59 = scmp.ne.s32.totalorder %s50, %s51
      %p60 = scmp.eq.s32.totalorder %s19, 0
      %p61 = por %p59, %p60
      %p62 = scmp.ne.s32.totalorder %s50, %s51
      %p63 = scmp.eq.s32.totalorder %s20, 1
      %p64 = por %p62, %p63
      %p66 = scmp.ne.s32.totalorder %s51, %s65
      %p67 = scmp.eq.s32.totalorder %s20, 0
      %p68 = por %p66, %p67
      %s70 = sadd.s32 %s69, 1
      %p73 = scmp.eq.s32.totalorder %s14, 1
      %p74 = scmp.ne.s32.totalorder %s69, %s71
      %p75 = scmp.eq.s32.totalorder %s14, 0
      %p76 = por %p74, %p75
      %p77 = scmp.ne.s32.totalorder %s69, %s71
      %p78 = scmp.eq.s32.totalorder %s19, 1
      %p79 = por %p77, %p78
      %p80 = scmp.ne.s32.totalorder %s71, %s72
      %p81 = scmp.eq.s32.totalorder %s19, 0
      %p82 = por %p80, %p81
      %p83 = scmp.ne.s32.totalorder %s71, %s72
      %p84 = scmp.eq.s32.totalorder %s20, 1
      %p85 = por %p83, %p84
      %p87 = scmp.ne.s32.totalorder %s72, %s86
      %p88 = scmp.eq.s32.totalorder %s20, 0
      %p89 = por %p87, %p88
      %s91 = sadd.s32 %s90, 1
      %p94 = scmp.eq.s32.totalorder %s14, 1
      %p95 = scmp.ne.s32.totalorder %s90, %s92
      %p96 = scmp.eq.s32.totalorder %s14, 0
      %p97 = por %p95, %p96
      %p98 = scmp.ne.s32.totalorder %s90, %s92
      %p99 = scmp.eq.s32.totalorder %s19, 1
      %p100 = por %p98, %p99
      %p101 = scmp.ne.s32.totalorder %s92, %s93
      %p102 = scmp.eq.s32.totalorder %s19, 0
      %p103 = por %p101, %p102
      %p104 = scmp.ne.s32.totalorder %s92, %s93
      %p105 = scmp.eq.s32.totalorder %s20, 1
      %p106 = por %p104, %p105
      %p108 = scmp.ne.s32.totalorder %s93, %s107
      %p109 = scmp.eq.s32.totalorder %s20, 0
      %p110 = por %p108, %p109
      %s112 = sadd.s32 %s111, 1
      %p115 = scmp.eq.s32.totalorder %s14, 1
      %p116 = scmp.ne.s32.totalorder %s111, %s113
      %p117 = scmp.eq.s32.totalorder %s14, 0
      %p118 = por %p116, %p117
      %p119 = scmp.ne.s32.totalorder %s111, %s113
      %p120 = scmp.eq.s32.totalorder %s19, 1
      %p121 = por %p119, %p120
      %p122 = scmp.ne.s32.totalorder %s113, %s114
      %p123 = scmp.eq.s32.totalorder %s19, 0
      %p124 = por %p122, %p123
      %p125 = scmp.ne.s32.totalorder %s113, %s114
      %p126 = scmp.eq.s32.totalorder %s20, 1
      %p127 = por %p125, %p126
      %p129 = scmp.ne.s32.totalorder %s114, %s128
      %p130 = scmp.eq.s32.totalorder %s20, 0
      %p131 = por %p129, %p130
      %s132 = ssub.s32 %s14, %s21
      %p133 = scmp.eq.s32.totalorder %s132, 0
      %s135 = sadd.s32 %s134, 1
      %s136 = scalar_select %p133, %s134, %s135
      %p139 = pneg %p133
      %p140 = scmp.eq.s32.totalorder %s14, 1
      %p141 = por %p139, %p140
      %p142 = scmp.ne.s32.totalorder %s134, %s137
      %p143 = scmp.eq.s32.totalorder %s14, 0
      %p144 = por %p142, %p143
      %p145 = scmp.ne.s32.totalorder %s134, %s137
      %p146 = scmp.eq.s32.totalorder %s19, 1
      %p147 = por %p145, %p146
      %p148 = scmp.ne.s32.totalorder %s137, %s138
      %p149 = scmp.eq.s32.totalorder %s19, 0
      %p150 = por %p148, %p149
      %p151 = scmp.ne.s32.totalorder %s137, %s138
      %p152 = scmp.eq.s32.totalorder %s20, 1
      %p153 = por %p151, %p152
      %p155 = scmp.ne.s32.totalorder %s138, %s154
      %p156 = scmp.eq.s32.totalorder %s20, 0
      %p157 = por %p155, %p156
      %p158 = scmp.le.s32.totalorder 1, %s14
      %p159 = scmp.lt.s32.totalorder %s14, 3
      %p160 = pnand %p158, %p159
      %p161 = pneg %p160
      // Predicated region
      $region9: #{tpu_custom_call.1} parent=5 // pred_check
        _
      $region10: #{tpu_custom_call.1} parent=5 // pred_check_branch
        %163 = sbr.rel (%p160) target = $region12
      $region11: #{tpu_custom_call.1} parent=5 // pred_region
        %s164 = ssub.s32 %s14, 1
        // Predicated region
        $region13: #{tpu_custom_call.1} parent=11 // pred_check
          %p165 = pneg %p61
        $region14: #{tpu_custom_call.1} parent=11 // pred_check_branch
          %167 = sbr.rel (%p165) target = $region16
        $region15: #{tpu_custom_call.1} parent=11 // pred_region
          _
        $region16: #{tpu_custom_call.1} parent=11 // pred_fallthru
          _
        // Predicated region
        $region17: #{tpu_custom_call.1} parent=11 // pred_check
          %p168 = pneg %p82
        $region18: #{tpu_custom_call.1} parent=11 // pred_check_branch
          %170 = sbr.rel (%p168) target = $region20
        $region19: #{tpu_custom_call.1} parent=11 // pred_region
          _
        $region20: #{tpu_custom_call.1} parent=11 // pred_fallthru
          _
        // Predicated region
        $region21: #{tpu_custom_call.1} parent=11 // pred_check
          %p171 = pneg %p103
        $region22: #{tpu_custom_call.1} parent=11 // pred_check_branch
          %173 = sbr.rel (%p171) target = $region24
        $region23: #{tpu_custom_call.1} parent=11 // pred_region
          _
        $region24: #{tpu_custom_call.1} parent=11 // pred_fallthru
          _
        // Predicated region
        $region25: #{tpu_custom_call.1} parent=11 // pred_check
          %p174 = pneg %p124
        $region26: #{tpu_custom_call.1} parent=11 // pred_check_branch
          %176 = sbr.rel (%p174) target = $region28
        $region27: #{tpu_custom_call.1} parent=11 // pred_region
          _
        $region28: #{tpu_custom_call.1} parent=11 // pred_fallthru
          _
      $region12: #{tpu_custom_call.1} parent=5 // pred_fallthru
        _
      %p177 = scmp.lt.s32.totalorder %s14, 2
      // Predicated region
      $region29: #{tpu_custom_call.1} parent=5 // pred_check
        %p178 = pneg %p177
      $region30: #{tpu_custom_call.1} parent=5 // pred_check_branch
        %180 = sbr.rel (%p178) target = $region32
      $region31: #{tpu_custom_call.1} parent=5 // pred_region
        // Predicated region
        $region33: #{tpu_custom_call.1} parent=31 // pred_check
          %p181 = pneg %p34
        $region34: #{tpu_custom_call.1} parent=31 // pred_check_branch
          %183 = sbr.rel (%p181) target = $region36
        $region35: #{tpu_custom_call.1} parent=31 // pred_region
          %s184 = smul.u32 2, %s14
          %p185 = scmp.lt.s32.totalorder %s184, 3
          %s186 = scalar_select %p185, %s184, 3
          %s187 = smul.addr %s186, 8
          %s188 = scalar_lea.vmem %s0, %s187
          %s189 = smul.u32 2, %s14
        $region36: #{tpu_custom_call.1} parent=31 // pred_fallthru
          _
      $region32: #{tpu_custom_call.1} parent=5 // pred_fallthru
        _
      %p190 = scmp.le.s32.totalorder 1, %s14
      %p191 = scmp.lt.s32.totalorder %s14, 3
      %p192 = pnand %p190, %p191
      %p193 = pneg %p192
      // Predicated region
      $region37: #{tpu_custom_call.1} parent=5 // pred_check
        _
      $region38: #{tpu_custom_call.1} parent=5 // pred_check_branch
        %195 = sbr.rel (%p192) target = $region40
      $region39: #{tpu_custom_call.1} parent=5 // pred_region
        %s196 = ssub.s32 %s14, 1
        %s197 = smul.u32 2, %s19
        %p198 = scmp.lt.s32.totalorder %s197, 3
        %s199 = scalar_select %p198, %s197, 3
        %s200 = smul.addr %s199, 8
        %s201 = scalar_lea.vmem %s0, %s200
        %p202 = pneg %p40
        %p203 = pneg %p37
        %p204 = pneg %p61
        %p205 = pneg %p58
        %p206 = pneg %p82
        %p207 = pneg %p79
        %p208 = pneg %p103
        %p209 = pneg %p100
        %p210 = pneg %p124
        %p211 = pneg %p121
        %p212 = pneg %p150
        %p213 = pneg %p147
        %s214 = sand.u32 %s137, 1
        %s215 = scalar_lea.sflag [#allocation3], %s214
        %s216 = sand.u32 %s137, 1
        %s217 = smul.addr %s216, 16
        %s218 = scalar_lea.vmem [#allocation2], %s217
        %s219 = smul.u32 2, %s19
        %p220 = scmp.lt.s32.totalorder %s219, 3
        %s221 = scalar_select %p220, %s219, 3
        %s222 = smul.addr %s221, 8
        %s223 = scalar_lea.vmem %s0, %s222
        %s224 = smul.u32 2, %s19
        %s225 = smul.u32 2, %s19
        %v226 = vld [vmem:[%s223] sm:$0xff]
        %v227 = vld [vmem:[%s223 + $0x8] sm:$0xff]
        %v228 = vld [vmem:[%s1] sm:$0xff]
        %v229 = vld [vmem:[%s1 + $0x8] sm:$0xff]
        %v230 = vld [vmem:[%s1 + $0x10] sm:$0xff]
        %v231 = vld [vmem:[%s1 + $0x18] sm:$0xff]
        %v232 = vld [vmem:[%s1 + $0x20] sm:$0xff]
        %v233 = vld [vmem:[%s1 + $0x28] sm:$0xff]
        %v234 = vld [vmem:[%s1 + $0x30] sm:$0xff]
        %v235 = vld [vmem:[%s1 + $0x38] sm:$0xff]
        %v236 = vld [vmem:[%s2] sm:$0x1]
        %v238 = vlaneseq
        %v239 = vshrl.u32 %v238, 7
        %v240 = vsub.s32 0, %v239
        %v241 = vrot.slane %v236, %v240
        %vm243 = vcmask 523264
        %v245 = vsel %vm243, %v226, 0
        %v248 = vsel %vm243, %v227, 0
        %250 = vmatprep.subr.mxu0 0.0
        %251 = vmatpush1.msra.mxu0 %v228
        %252 = vmatprep.subr.mxu0 0.0
        %253 = vmatpush1.msra.mxu0 %v229
        %254 = vmatprep.subr.mxu0 0.0
        %255 = vmatpush1.msra.mxu0 %v230
        %256 = vmatprep.subr.mxu0 0.0
        %257 = vmatpush1.msra.mxu0 %v231
        %258 = vmatprep.subr.mxu0 0.0
        %259 = vmatpush1.msra.mxu0 %v232
        %260 = vmatprep.subr.mxu0 0.0
        %261 = vmatpush1.msra.mxu0 %v233
        %262 = vmatprep.subr.mxu0 0.0
        %263 = vmatpush1.msra.mxu0 %v234
        %264 = vmatprep.subr.mxu0 0.0
        %265 = vmatpush1.msra.mxu0 %v235
        %266 = vmatprep.subr.mxu0 0.0
        %267 = vmatpush1.msra.mxu0 0.0
        %268 = vmatprep.subr.mxu0 0.0
        %269 = vmatpush1.msra.mxu0 0.0
        %270 = vmatprep.subr.mxu0 0.0
        %271 = vmatpush1.msra.mxu0 0.0
        %272 = vmatprep.subr.mxu0 0.0
        %273 = vmatpush1.msra.mxu0 0.0
        %274 = vmatprep.subr.mxu0 0.0
        %275 = vmatpush1.msra.mxu0 0.0
        %276 = vmatprep.subr.mxu0 0.0
        %277 = vmatpush1.msra.mxu0 0.0
        %278 = vmatprep.subr.mxu0 0.0
        %279 = vmatpush1.msra.mxu0 0.0
        %280 = vmatprep.subr.mxu0 0.0
        %281 = vmatpush1.msra.mxu0 0.0
        %282 = vmatprep.subr.mxu0 0.0
        %283 = vmatpush1.msra.mxu0 0.0
        %284 = vmatprep.subr.mxu0 0.0
        %285 = vmatpush1.msra.mxu0 0.0
        %286 = vmatprep.subr.mxu0 0.0
        %287 = vmatpush1.msra.mxu0 0.0
        %288 = vmatprep.subr.mxu0 0.0
        %289 = vmatpush1.msra.mxu0 0.0
        %290 = vmatprep.subr.mxu0 0.0
        %291 = vmatpush1.msra.mxu0 0.0
        %292 = vmatprep.subr.mxu0 0.0
        %293 = vmatpush1.msra.mxu0 0.0
        %294 = vmatprep.subr.mxu0 0.0
        %295 = vmatpush1.msra.mxu0 0.0
        %296 = vmatprep.subr.mxu0 0.0
        %297 = vmatpush1.msra.mxu0 0.0
        %298 = vmatprep.subr.mxu0 0.0
        %299 = vmatpush1.msra.mxu0 0.0
        %300 = vmatprep.subr.mxu0 0.0
        %301 = vmatpush1.msra.mxu0 0.0
        %302 = vmatprep.subr.mxu0 0.0
        %303 = vmatpush1.msra.mxu0 0.0
        %304 = vmatprep.subr.mxu0 0.0
        %305 = vmatpush1.msra.mxu0 0.0
        %306 = vmatprep.subr.mxu0 0.0
        %307 = vmatpush1.msra.mxu0 0.0
        %308 = vmatprep.subr.mxu0 0.0
        %309 = vmatpush1.msra.mxu0 0.0
        %310 = vmatprep.subr.mxu0 0.0
        %311 = vmatpush1.msra.mxu0 0.0
        %312 = vmatprep.subr.mxu0 0.0
        %313 = vmatpush1.msra.mxu0 0.0
        %314 = vmatprep.mubr.f32.mxu0 0.0
        %315 = vmatmul.mubr.f32.gmra.mrb[0].mxu0 %v245
        %v316 = vpop.f32.mrb[0].mxu0
        %v317 = vadd.f32 %v241, %v316
        %v318 = vpop.f32.mrb[0].mxu0
        %319 = vmatprep.mubr.f32.mxu0 0.0
        %320 = vmatmul.mubr.f32.gmra.mrb[0].mxu0 %v248
        %v321 = vpop.f32.mrb[0].mxu0
        %v322 = vadd.f32 %v241, %v321
        %v323 = vpop.f32.mrb[0].mxu0
        %324 = vdwg.mxu0
        %vm325 = vcmask 261120
        %326 = vst.msk [vmem:[%s218] sm:$0xff] %vm325, %v317
        %327 = vst.msk [vmem:[%s218 + $0x8] sm:$0xff] %vm325, %v322
        %s328 = sand.u32 %s137, 1
        %s329 = scalar_lea.sflag [#allocation3], %s328
        %s330 = sand.u32 %s137, 1
        %s331 = smul.addr %s330, 16
        %s332 = scalar_lea.vmem [#allocation2], %s331
        // Predicated region
        $region41: #{tpu_custom_call.1} parent=39 // pred_check
          %p333 = pneg %p147
        $region42: #{tpu_custom_call.1} parent=39 // pred_check_branch
          %335 = sbr.rel (%p333) target = $region44
        $region43: #{tpu_custom_call.1} parent=39 // pred_region
          %s336 = smul.u32 2, %s19
          %s338 = ssub.s32 256, 256
          %339 = vsyncadd %s329, %s338
          %s340 = smul.addr %s336, 128
          %s341 = scalar_lea.hbm %s5, %s340
          %s342 = sshll.u32 %s332, 4
          %s343 = int_to_ptr.vmem [resolvable:$true] %s342
          %348 = dma.vmem_to_hbm [thread:$0]  %s343, 256, %s341, %s329, 128, 128, 8
        $region44: #{tpu_custom_call.1} parent=39 // pred_fallthru
          _
      $region40: #{tpu_custom_call.1} parent=5 // pred_fallthru
        _
      %p349 = scmp.le.s32.totalorder 2, %s14
      // Predicated region
      $region45: #{tpu_custom_call.1} parent=5 // pred_check
        %p350 = pneg %p349
      $region46: #{tpu_custom_call.1} parent=5 // pred_check_branch
        %352 = sbr.rel (%p350) target = $region48
      $region47: #{tpu_custom_call.1} parent=5 // pred_region
        %s353 = ssub.s32 %s14, 2
        // Predicated region
        $region49: #{tpu_custom_call.1} parent=47 // pred_check
          %p354 = pneg %p153
        $region50: #{tpu_custom_call.1} parent=47 // pred_check_branch
          %356 = sbr.rel (%p354) target = $region52
        $region51: #{tpu_custom_call.1} parent=47 // pred_region
          %s357 = sand.u32 %s138, 1
          %s358 = scalar_lea.sflag [#allocation3], %s357
          %s359 = sand.u32 %s138, 1
          %s360 = smul.addr %s359, 16
          %s361 = scalar_lea.vmem [#allocation2], %s360
          %362 = dma.done %s358, 256
        $region52: #{tpu_custom_call.1} parent=47 // pred_fallthru
          _
      $region48: #{tpu_custom_call.1} parent=5 // pred_fallthru
        _
    $region6: #{tpu_custom_call.1} parent=1 // loop_footer
      %s18 = sadd.s32 1, %s14
    $region7: #{tpu_custom_call.1} parent=1 // loop_footer_branch
      %13 = sbr.rel target = $region3
    $region8: #{tpu_custom_call.1} parent=1 // loop_exit
      _
    %363 = vsyncpa [#allocation3], 1
    %s364 = scalar_lea.sflag [#allocation3], 1
    %365 = vsyncpa %s364, 1

</llo_original>
